<compile_context>
chip_gen: v7x
topology: tpu7x:2x2x1
jax: 0.10.0
libtpu: 0.0.40
codegen_flags: <defaults>
</compile_context>

<pallas_src>
from functools import partial

import jax
import jax.numpy as jnp
from jax.experimental import pallas as pl
from jax.experimental.pallas import tpu as pltpu


# ----------------------------- pass 1: conv + BN partial stats -----------------------------
def _conv_stats_kernel(xf_ref, wb_ref, y_ref, sum_ref, ssq_ref):
    """One image per grid step (banded-weight GEMM formulation).

    xf_ref:  (1, H+2, W*Cin)      bf16  vertically zero-padded, lane-flattened image rows
    wb_ref:  (3, W*Cin, W*Cout)   bf16  banded weights (one band per kernel row ky);
                                        horizontal pad=1 is encoded as zero band entries
    y_ref:   (H, W*Cout)          bf16  lane-dense conv output rows for this image
    sum_ref: (1, 1, W*Cout)       f32   per-(w,co) column sum over this image's H rows
    ssq_ref: (1, 1, W*Cout)       f32   per-(w,co) column sum of squares
    """
    H = y_ref.shape[0]
    lanes = y_ref.shape[1]  # W * Cout

    # 3 MXU pushes with K = W*Cin, f32 accumulation.
    acc = jnp.dot(xf_ref[0, 0:H, :], wb_ref[0], preferred_element_type=jnp.float32)
    for ky in (1, 2):
        acc = acc + jnp.dot(xf_ref[0, ky:ky + H, :], wb_ref[ky],
                            preferred_element_type=jnp.float32)

    y_ref[...] = acc.astype(y_ref.dtype)

    # BatchNorm partial statistics from the f32 accumulator (finished in the wrapper).
    # TODO(synk): switch to centered/Welford accumulation for production shapes where
    # E[y^2]-E[y]^2 cancellation matters.
    sum_ref[...] = jnp.sum(acc, axis=0, keepdims=True).reshape(1, 1, lanes)
    ssq_ref[...] = jnp.sum(acc * acc, axis=0, keepdims=True).reshape(1, 1, lanes)


# ----------------------------- pass 2: BN affine + LeakyReLU -----------------------------
def _bn_lrelu_kernel(y_ref, scale_ref, bias_ref, o_ref, *, negative_slope):
    """Lane-dense epilogue tile.

    y_ref/o_ref: (TR, W*Cout) bf16   conv rows (aliased in place)
    scale_ref:   (1, W*Cout)  f32    per-channel BN scale tiled over W
    bias_ref:    (1, W*Cout)  f32    per-channel BN bias  tiled over W
    """
    y = y_ref[...].astype(jnp.float32) * scale_ref[...] + bias_ref[...]
    o_ref[...] = jnp.maximum(y, negative_slope * y).astype(o_ref.dtype)  # one vmax


# ----------------------------------------- glue -----------------------------------------
def _vmem_limit_bytes(default=32 * 1024 * 1024):
    """Generation-aware scoped-VMEM budget (v7x: ~48 MiB, v5e/v6e: up to 96 MiB)."""
    try:
        info = pltpu.get_tpu_info()
        cap = getattr(info, "vmem_capacity_bytes", None)
        if cap is None:
            return default
        return int(min(cap * 3 // 4, 96 * 1024 * 1024))
    except Exception:
        return default


def _largest_row_tile(rows, cap=2048):
    """Largest multiple-of-8 divisor of `rows` that is <= cap (amortizes grid-step cost)."""
    for cand in range(min(rows, cap), 7, -1):
        if cand % 8 == 0 and rows % cand == 0:
            return cand
    # TODO(synk): mask/pad the remainder for large `rows` with no multiple-of-8 divisor
    # instead of falling back to a single whole-slab block.
    return rows


def conv_bn_leaky_block(x_nchw, weight_oihw, gamma, beta, *,
                        eps=1e-5, negative_slope=0.1):
    """Pallas implementation of ConvBnLeakyBlock.forward (k=3, stride=1, pad=1)."""
    N, Cin, H, W = x_nchw.shape
    Cout = weight_oihw.shape[0]
    lanes = W * Cout

    # NCHW -> (N, H, W*Cin) bf16 with a 1-row vertical halo.  Transpose + cast + reshape
    # + pad fuse into one XLA pass over the (small) input; horizontal padding is handled
    # by the banded weights, so no (W+2) copy is materialized.
    xf = jnp.transpose(x_nchw, (0, 2, 3, 1)).astype(jnp.bfloat16).reshape(N, H, W * Cin)
    xf = jnp.pad(xf, ((0, 0), (1, 1), (0, 0)))                      # (N, H+2, W*Cin)

    # Banded weights: wband[ky, v*Cin+ci, w*Cout+co] = weight[co, ci, ky, kx] where
    # v = w + kx - 1 is a valid input column (cross-correlation, like PyTorch).
    wk = jnp.transpose(weight_oihw, (2, 3, 1, 0)).astype(jnp.float32)  # (3,3,Cin,Cout)
    P = jnp.stack([jnp.eye(W, k=1, dtype=jnp.float32),                 # kx=0: v = w-1
                   jnp.eye(W, dtype=jnp.float32),                      # kx=1: v = w
                   jnp.eye(W, k=-1, dtype=jnp.float32)])               # kx=2: v = w+1
    wband = jnp.einsum("xvw,yxio->yviwo", P, wk).reshape(3, W * Cin, lanes)
    wband = wband.astype(jnp.bfloat16)

    cparams = pltpu.CompilerParams(
        dimension_semantics=("parallel",),        # megacore splits the grid on v7x
        vmem_limit_bytes=_vmem_limit_bytes(),     # generation-aware scoped-VMEM budget
    )

    # ---- pass 1: per-image banded conv GEMM (bf16 MXU, f32 acc) + partial BN stats ----
    # TODO(synk): add an H-row tiling axis with a 1-row halo for v7x when N is 1/odd or
    # per-image blocks approach the 64 MiB VMEM (keeps both TCs busy and bounds VMEM).
    conv_flat, sums, ssqs = pl.pallas_call(
        _conv_stats_kernel,
        out_shape=(
            jax.ShapeDtypeStruct((N * H, lanes), jnp.bfloat16),
            jax.ShapeDtypeStruct((N, 1, lanes), jnp.float32),
            jax.ShapeDtypeStruct((N, 1, lanes), jnp.float32),
        ),
        grid=(N,),
        in_specs=[
            pl.BlockSpec((1, H + 2, W * Cin), lambda n: (n, 0, 0)),
            pl.BlockSpec((3, W * Cin, lanes), lambda n: (0, 0, 0)),
        ],
        out_specs=(
            pl.BlockSpec((H, lanes), lambda n: (n, 0)),
            pl.BlockSpec((1, 1, lanes), lambda n: (n, 0, 0)),
            pl.BlockSpec((1, 1, lanes), lambda n: (n, 0, 0)),
        ),
        compiler_params=cparams,
    )(xf, wband)

    # ---- fold training-mode BatchNorm into per-channel scale/bias (tiny wrapper math) ----
    cnt = float(N * H * W)
    ch_sum = jnp.sum(sums.reshape(N, W, Cout), axis=(0, 1))                  # (Cout,)
    ch_ssq = jnp.sum(ssqs.reshape(N, W, Cout), axis=(0, 1))
    mean = ch_sum / cnt
    var = jnp.maximum(ch_ssq / cnt - mean * mean, 0.0)                        # biased var
    scale = gamma.astype(jnp.float32) * jax.lax.rsqrt(var + eps)
    bias = beta.astype(jnp.float32) - mean * scale
    # Tile per-channel vectors to the lane-dense (w, c) layout: lane index = w*Cout + c.
    scale_t = jnp.tile(scale, W).reshape(1, lanes)
    bias_t = jnp.tile(bias, W).reshape(1, lanes)

    # ---- pass 2: lane-dense BN affine + LeakyReLU over large row tiles (in place) ----
    rows = N * H
    tr = _largest_row_tile(rows)
    out2d = pl.pallas_call(
        partial(_bn_lrelu_kernel, negative_slope=negative_slope),
        out_shape=jax.ShapeDtypeStruct((rows, lanes), jnp.bfloat16),
        grid=(rows // tr,),
        in_specs=[
            pl.BlockSpec((tr, lanes), lambda i: (i, 0)),
            pl.BlockSpec((1, lanes), lambda i: (0, 0)),
            pl.BlockSpec((1, lanes), lambda i: (0, 0)),
        ],
        out_specs=pl.BlockSpec((tr, lanes), lambda i: (i, 0)),
        input_output_aliases={0: 0},              # reuse the conv intermediate buffer
        compiler_params=cparams,
    )(conv_flat, scale_t, bias_t)

    # Back to the PyTorch NCHW convention (reshape is free; transpose+cast is one XLA op).
    # TODO(synk): skip this relayout if the downstream consumer accepts NHWC/lane-dense.
    return jnp.transpose(out2d.reshape(N, H, W, Cout), (0, 3, 1, 2)).astype(jnp.float32)


def _reference(x_nchw, weight_oihw, gamma, beta, eps=1e-5, negative_slope=0.1):
    """Pure-JAX f32 reference of the PyTorch forward (training-mode BN)."""
    y = jax.lax.conv_general_dilated(
        x_nchw, weight_oihw, window_strides=(1, 1), padding=((1, 1), (1, 1)),
        dimension_numbers=("NCHW", "OIHW", "NCHW"),
        precision=jax.lax.Precision.HIGHEST,
    )
    mean = y.mean(axis=(0, 2, 3), keepdims=True)
    var = jnp.square(y - mean).mean(axis=(0, 2, 3), keepdims=True)
    yh = (y - mean) * jax.lax.rsqrt(var + eps)
    yh = yh * gamma.reshape(1, -1, 1, 1) + beta.reshape(1, -1, 1, 1)
    return jnp.where(yh >= 0, yh, negative_slope * yh)


if __name__ == "__main__":
    key = jax.random.PRNGKey(0)
    k_x, k_w = jax.random.split(key)

    N, Cin, Cout, H, W = 2, 4, 8, 16, 16

    x = jax.random.normal(k_x, (N, Cin, H, W), dtype=jnp.float32)
    # Conv2d weight (bias=False), OIHW like PyTorch.
    weight = jax.random.normal(k_w, (Cout, Cin, 3, 3), dtype=jnp.float32) * 0.1
    # BatchNorm2d default affine init.
    gamma = jnp.ones((Cout,), dtype=jnp.float32)
    beta = jnp.zeros((Cout,), dtype=jnp.float32)

    fwd = jax.jit(conv_bn_leaky_block)          # fuse the wrapper glue (pad/transpose/stats)
    out = jax.block_until_ready(fwd(x, weight, gamma, beta))

    ref = _reference(x, weight, gamma, beta)
    assert out.shape == (N, Cout, H, W)
    # bf16 MXU operands + bf16 intermediate storage (f32 accumulation & f32 batch stats)
    # -> slightly looser tolerance than pure f32.
    assert jnp.allclose(out, ref, rtol=4e-2, atol=4e-2), "mismatch vs reference"

    print("KERNEL_OK")
</pallas_src>

<mosaic_0001>
module attributes {stable_mosaic.version = 11 : i64} {
  func.func @_conv_stats_kernel(%arg0: i32, %arg1: memref<1x18x64xbf16, #tpu.memory_space<vmem>>, %arg2: memref<3x64x128xbf16, #tpu.memory_space<vmem>>, %arg3: memref<16x128xbf16, #tpu.memory_space<vmem>>, %arg4: memref<1x1x128xf32, #tpu.memory_space<vmem>>, %arg5: memref<1x1x128xf32, #tpu.memory_space<vmem>>) attributes {dimension_semantics = [#tpu.dimension_semantics<parallel>], iteration_bounds = array<i64: 2>, scalar_prefetch = 0 : i64, scratch_operands = 0 : i64, tpu.core_type = #tpu.core_type<tc>, window_params = [{transform_indices = @transform_0, window_bounds = array<i64: 1, 18, 64>}, {pipeline_mode = #tpu.pipeline_mode<synchronous>, transform_indices = @transform_1, window_bounds = array<i64: 3, 64, 128>}, {transform_indices = @transform_2, window_bounds = array<i64: 16, 128>}, {transform_indices = @transform_3, window_bounds = array<i64: 1, 1, 128>}, {transform_indices = @transform_4, window_bounds = array<i64: 1, 1, 128>}]} {
    %c0 = arith.constant 0 : index
    %c0_0 = arith.constant 0 : index
    %c0_1 = arith.constant 0 : index
    %0 = vector.load %arg1[%c0, %c0_0, %c0_1] : memref<1x18x64xbf16, #tpu.memory_space<vmem>>, vector<1x16x64xbf16>
    %1 = vector.shape_cast %0 : vector<1x16x64xbf16> to vector<16x64xbf16>
    %c0_2 = arith.constant 0 : index
    %c0_3 = arith.constant 0 : index
    %c0_4 = arith.constant 0 : index
    %2 = vector.load %arg2[%c0_2, %c0_3, %c0_4] : memref<3x64x128xbf16, #tpu.memory_space<vmem>>, vector<1x64x128xbf16>
    %3 = vector.shape_cast %2 : vector<1x64x128xbf16> to vector<64x128xbf16>
    %cst = arith.constant dense<0.000000e+00> : vector<16x128xf32>
    %4 = tpu.matmul %1, %3, %cst {dimension_numbers = #tpu.dot_dimension_numbers<[1], [0], [0], [1], [0, 0, 1, 1], [], []>} : vector<16x64xbf16>, vector<64x128xbf16>, vector<16x128xf32> -> vector<16x128xf32>
    %c0_5 = arith.constant 0 : index
    %c1 = arith.constant 1 : index
    %c0_6 = arith.constant 0 : index
    %5 = vector.load %arg1[%c0_5, %c1, %c0_6] : memref<1x18x64xbf16, #tpu.memory_space<vmem>>, vector<1x16x64xbf16>
    %6 = vector.shape_cast %5 : vector<1x16x64xbf16> to vector<16x64xbf16>
    %c1_7 = arith.constant 1 : index
    %c0_8 = arith.constant 0 : index
    %c0_9 = arith.constant 0 : index
    %7 = vector.load %arg2[%c1_7, %c0_8, %c0_9] : memref<3x64x128xbf16, #tpu.memory_space<vmem>>, vector<1x64x128xbf16>
    %8 = vector.shape_cast %7 : vector<1x64x128xbf16> to vector<64x128xbf16>
    %cst_10 = arith.constant dense<0.000000e+00> : vector<16x128xf32>
    %9 = tpu.matmul %6, %8, %cst_10 {dimension_numbers = #tpu.dot_dimension_numbers<[1], [0], [0], [1], [0, 0, 1, 1], [], []>} : vector<16x64xbf16>, vector<64x128xbf16>, vector<16x128xf32> -> vector<16x128xf32>
    %10 = arith.addf %4, %9 : vector<16x128xf32>
    %c0_11 = arith.constant 0 : index
    %c2 = arith.constant 2 : index
    %c0_12 = arith.constant 0 : index
    %11 = vector.load %arg1[%c0_11, %c2, %c0_12] : memref<1x18x64xbf16, #tpu.memory_space<vmem>>, vector<1x16x64xbf16>
    %12 = vector.shape_cast %11 : vector<1x16x64xbf16> to vector<16x64xbf16>
    %c2_13 = arith.constant 2 : index
    %c0_14 = arith.constant 0 : index
    %c0_15 = arith.constant 0 : index
    %13 = vector.load %arg2[%c2_13, %c0_14, %c0_15] : memref<3x64x128xbf16, #tpu.memory_space<vmem>>, vector<1x64x128xbf16>
    %14 = vector.shape_cast %13 : vector<1x64x128xbf16> to vector<64x128xbf16>
    %cst_16 = arith.constant dense<0.000000e+00> : vector<16x128xf32>
    %15 = tpu.matmul %12, %14, %cst_16 {dimension_numbers = #tpu.dot_dimension_numbers<[1], [0], [0], [1], [0, 0, 1, 1], [], []>} : vector<16x64xbf16>, vector<64x128xbf16>, vector<16x128xf32> -> vector<16x128xf32>
    %16 = arith.addf %10, %15 : vector<16x128xf32>
    %17 = arith.truncf %16 : vector<16x128xf32> to vector<16x128xbf16>
    %c0_17 = arith.constant 0 : index
    %c0_18 = arith.constant 0 : index
    %18 = vector.load %arg3[%c0_17, %c0_18] : memref<16x128xbf16, #tpu.memory_space<vmem>>, vector<16x128xbf16>
    tpu.vector_store %arg3[%c0_17, %c0_18], %17 {strides = array<i32>} : memref<16x128xbf16, #tpu.memory_space<vmem>>, vector<16x128xbf16>,
    %cst_19 = arith.constant dense<0.000000e+00> : vector<128xf32>
    %19 = vector.multi_reduction <add>, %16, %cst_19 [0] : vector<16x128xf32> to vector<128xf32>
    %20 = vector.shape_cast %19 : vector<128xf32> to vector<1x128xf32>
    %21 = vector.shape_cast %20 : vector<1x128xf32> to vector<1x1x128xf32>
    %c0_20 = arith.constant 0 : index
    %c0_21 = arith.constant 0 : index
    %c0_22 = arith.constant 0 : index
    %22 = vector.load %arg4[%c0_20, %c0_21, %c0_22] : memref<1x1x128xf32, #tpu.memory_space<vmem>>, vector<1x1x128xf32>
    tpu.vector_store %arg4[%c0_20, %c0_21, %c0_22], %21 {strides = array<i32>} : memref<1x1x128xf32, #tpu.memory_space<vmem>>, vector<1x1x128xf32>,
    %23 = arith.mulf %16, %16 : vector<16x128xf32>
    %cst_23 = arith.constant dense<0.000000e+00> : vector<128xf32>
    %24 = vector.multi_reduction <add>, %23, %cst_23 [0] : vector<16x128xf32> to vector<128xf32>
    %25 = vector.shape_cast %24 : vector<128xf32> to vector<1x128xf32>
    %26 = vector.shape_cast %25 : vector<1x128xf32> to vector<1x1x128xf32>
    %c0_24 = arith.constant 0 : index
    %c0_25 = arith.constant 0 : index
    %c0_26 = arith.constant 0 : index
    %27 = vector.load %arg5[%c0_24, %c0_25, %c0_26] : memref<1x1x128xf32, #tpu.memory_space<vmem>>, vector<1x1x128xf32>
    tpu.vector_store %arg5[%c0_24, %c0_25, %c0_26], %26 {strides = array<i32>} : memref<1x1x128xf32, #tpu.memory_space<vmem>>, vector<1x1x128xf32>,
    return
  }
  func.func @transform_0(%arg0: i32) -> (i32, i32, i32) {
    %c0_i32 = arith.constant 0 : i32
    %c0_i32_0 = arith.constant 0 : i32
    %c0_i32_1 = arith.constant 0 : i32
    return %arg0, %c0_i32, %c0_i32_0 : i32, i32, i32
  }
  func.func @transform_1(%arg0: i32) -> (i32, i32, i32) {
    %c0_i32 = arith.constant 0 : i32
    %c0_i32_0 = arith.constant 0 : i32
    %c0_i32_1 = arith.constant 0 : i32
    %c0_i32_2 = arith.constant 0 : i32
    return %c0_i32, %c0_i32_0, %c0_i32_1 : i32, i32, i32
  }
  func.func @transform_2(%arg0: i32) -> (i32, i32) {
    %c0_i32 = arith.constant 0 : i32
    %c0_i32_0 = arith.constant 0 : i32
    return %arg0, %c0_i32 : i32, i32
  }
  func.func @transform_3(%arg0: i32) -> (i32, i32, i32) {
    %c0_i32 = arith.constant 0 : i32
    %c0_i32_0 = arith.constant 0 : i32
    %c0_i32_1 = arith.constant 0 : i32
    return %arg0, %c0_i32, %c0_i32_0 : i32, i32, i32
  }
  func.func @transform_4(%arg0: i32) -> (i32, i32, i32) {
    %c0_i32 = arith.constant 0 : i32
    %c0_i32_0 = arith.constant 0 : i32
    %c0_i32_1 = arith.constant 0 : i32
    return %arg0, %c0_i32, %c0_i32_0 : i32, i32, i32
  }
}

module attributes {stable_mosaic.version = 11 : i64} {
  func.func @_bn_lrelu_kernel(%arg0: i32, %arg1: memref<32x128xbf16, #tpu.memory_space<vmem>>, %arg2: memref<1x128xf32, #tpu.memory_space<vmem>>, %arg3: memref<1x128xf32, #tpu.memory_space<vmem>>, %arg4: memref<32x128xbf16, #tpu.memory_space<vmem>>) attributes {dimension_semantics = [#tpu.dimension_semantics<parallel>], iteration_bounds = array<i64: 1>, scalar_prefetch = 0 : i64, scratch_operands = 0 : i64, tpu.core_type = #tpu.core_type<tc>, window_params = [{transform_indices = @transform_0, window_bounds = array<i64: 32, 128>}, {pipeline_mode = #tpu.pipeline_mode<synchronous>, transform_indices = @transform_1, window_bounds = array<i64: 1, 128>}, {pipeline_mode = #tpu.pipeline_mode<synchronous>, transform_indices = @transform_2, window_bounds = array<i64: 1, 128>}, {transform_indices = @transform_3, window_bounds = array<i64: 32, 128>}]} {
    %c0 = arith.constant 0 : index
    %c0_0 = arith.constant 0 : index
    %0 = vector.load %arg1[%c0, %c0_0] : memref<32x128xbf16, #tpu.memory_space<vmem>>, vector<32x128xbf16>
    %1 = arith.extf %0 : vector<32x128xbf16> to vector<32x128xf32>
    %c0_1 = arith.constant 0 : index
    %c0_2 = arith.constant 0 : index
    %2 = vector.load %arg2[%c0_1, %c0_2] : memref<1x128xf32, #tpu.memory_space<vmem>>, vector<1x128xf32>
    %3 = vector.broadcast %2 : vector<1x128xf32> to vector<32x128xf32>
    %4 = arith.mulf %1, %3 : vector<32x128xf32>
    %c0_3 = arith.constant 0 : index
    %c0_4 = arith.constant 0 : index
    %5 = vector.load %arg3[%c0_3, %c0_4] : memref<1x128xf32, #tpu.memory_space<vmem>>, vector<1x128xf32>
    %6 = vector.broadcast %5 : vector<1x128xf32> to vector<32x128xf32>
    %7 = arith.addf %4, %6 : vector<32x128xf32>
    %cst = arith.constant 1.000000e-01 : f32
    %8 = vector.broadcast %cst : f32 to vector<32x128xf32>
    %9 = arith.mulf %8, %7 : vector<32x128xf32>
    %10 = arith.maximumf %7, %9 : vector<32x128xf32>
    %11 = arith.truncf %10 : vector<32x128xf32> to vector<32x128xbf16>
    %c0_5 = arith.constant 0 : index
    %c0_6 = arith.constant 0 : index
    %12 = vector.load %arg4[%c0_5, %c0_6] : memref<32x128xbf16, #tpu.memory_space<vmem>>, vector<32x128xbf16>
    tpu.vector_store %arg4[%c0_5, %c0_6], %11 {strides = array<i32>} : memref<32x128xbf16, #tpu.memory_space<vmem>>, vector<32x128xbf16>,
    return
  }
  func.func @transform_0(%arg0: i32) -> (i32, i32) {
    %c0_i32 = arith.constant 0 : i32
    %c0_i32_0 = arith.constant 0 : i32
    return %arg0, %c0_i32 : i32, i32
  }
  func.func @transform_1(%arg0: i32) -> (i32, i32) {
    %c0_i32 = arith.constant 0 : i32
    %c0_i32_0 = arith.constant 0 : i32
    %c0_i32_1 = arith.constant 0 : i32
    return %c0_i32, %c0_i32_0 : i32, i32
  }
  func.func @transform_2(%arg0: i32) -> (i32, i32) {
    %c0_i32 = arith.constant 0 : i32
    %c0_i32_0 = arith.constant 0 : i32
    %c0_i32_1 = arith.constant 0 : i32
    return %c0_i32, %c0_i32_0 : i32, i32
  }
  func.func @transform_3(%arg0: i32) -> (i32, i32) {
    %c0_i32 = arith.constant 0 : i32
    %c0_i32_0 = arith.constant 0 : i32
    return %arg0, %c0_i32 : i32, i32
  }
}

</mosaic_0001>

<llo_original>
// kernel: tile.13
$region0: #{tile.13}
  #allocation0 [shape = 's32[1]{0}', space=sflag, size = 0x4, scoped, tag = 'scoped memory for tile.13']
  %s0 = inlined_call_operand.vmem [shape: f32[8], index: 0, kind: input, shape index: {}]
  %s1 = inlined_call_operand.vmem [shape: f32[16,8], index: 1, kind: output, shape index: {}]
  // Predicated region
  $region2: #{tile.13} parent=0 // pred_check
    _
  $region3: #{tile.13} parent=0 // pred_check_branch
    %3 = sbr.rel (0) target = $region5
  $region4: #{tile.13} parent=0 // pred_region
    _
  $region5: #{tile.13} parent=0 // pred_fallthru
    _
  %v4 = vld [vmem:[%s0] ss:$0 sm:$0xff]
  %5 = vst [vmem:[%s1] sm:$0xff] %v4
  %s6 = scalar_lea.vmem %s1, 8
  %7 = vst [vmem:[%s6] sm:$0xff] %v4

// kernel: tile.14
$region0: #{tile.14}
  %s0 = inlined_call_operand.vmem [shape: f32[16,8], index: 0, kind: input, shape index: {}]
  %s1 = inlined_call_operand.vmem [shape: f32[1,128], index: 1, kind: output, shape index: {}]
  $region1: #{tile.14} parent=0
    #allocation0 [shape = 'u8[4096]{0}', space=vmem, size = 0x1000, scoped, tag = 'scoped mem for output reshape']
    %v2 = vld [vmem:[%s0] sm:$0x1]
    %vm3 = vcmask 64512
    %4 = vst.msk [vmem:[#allocation0] sm:$0x1] %vm3, %v2
    %s5 = scalar_lea.vmem %s0, 15
    %v6 = vld [vmem:[%s5] sm:$0x1]
    %7 = vrot.lane.b32.xlu0 %v6, 120
    %v8 = vpop.permute.xlu0 %7
    %vm9 = vcmask 1048512
    %10 = vst.msk [vmem:[#allocation0] sm:$0x1] %vm9, %v8
    %s11 = scalar_lea.vmem %s0, 14
    %v12 = vld [vmem:[%s11] sm:$0x1]
    %13 = vrot.lane.b32.xlu0 %v12, 112
    %v14 = vpop.permute.xlu0 %13
    %vm15 = vcmask 982912
    %16 = vst.msk [vmem:[#allocation0] sm:$0x1] %vm15, %v14
    %s17 = scalar_lea.vmem %s0, 13
    %v18 = vld [vmem:[%s17] sm:$0x1]
    %19 = vrot.lane.b32.xlu0 %v18, 104
    %v20 = vpop.permute.xlu0 %19
    %vm21 = vcmask 917312
    %22 = vst.msk [vmem:[#allocation0] sm:$0x1] %vm21, %v20
    %s23 = scalar_lea.vmem %s0, 12
    %v24 = vld [vmem:[%s23] sm:$0x1]
    %25 = vrot.lane.b32.xlu0 %v24, 96
    %v26 = vpop.permute.xlu0 %25
    %vm27 = vcmask 851712
    %28 = vst.msk [vmem:[#allocation0] sm:$0x1] %vm27, %v26
    %s29 = scalar_lea.vmem %s0, 11
    %v30 = vld [vmem:[%s29] sm:$0x1]
    %31 = vrot.lane.b32.xlu0 %v30, 88
    %v32 = vpop.permute.xlu0 %31
    %vm33 = vcmask 786112
    %34 = vst.msk [vmem:[#allocation0] sm:$0x1] %vm33, %v32
    %s35 = scalar_lea.vmem %s0, 10
    %v36 = vld [vmem:[%s35] sm:$0x1]
    %37 = vrot.lane.b32.xlu0 %v36, 80
    %v38 = vpop.permute.xlu0 %37
    %vm39 = vcmask 720512
    %40 = vst.msk [vmem:[#allocation0] sm:$0x1] %vm39, %v38
    %s41 = scalar_lea.vmem %s0, 9
    %v42 = vld [vmem:[%s41] sm:$0x1]
    %43 = vrot.lane.b32.xlu0 %v42, 72
    %v44 = vpop.permute.xlu0 %43
    %vm45 = vcmask 654912
    %46 = vst.msk [vmem:[#allocation0] sm:$0x1] %vm45, %v44
    %s47 = scalar_lea.vmem %s0, 8
    %v48 = vld [vmem:[%s47] sm:$0x1]
    %49 = vrot.lane.b32.xlu0 %v48, 64
    %v50 = vpop.permute.xlu0 %49
    %vm51 = vcmask 589312
    %52 = vst.msk [vmem:[#allocation0] sm:$0x1] %vm51, %v50
    %s53 = scalar_lea.vmem %s0, 7
    %v54 = vld [vmem:[%s53] sm:$0x1]
    %55 = vrot.lane.b32.xlu0 %v54, 56
    %v56 = vpop.permute.xlu0 %55
    %vm57 = vcmask 523712
    %58 = vst.msk [vmem:[#allocation0] sm:$0x1] %vm57, %v56
    %s59 = scalar_lea.vmem %s0, 6
    %v60 = vld [vmem:[%s59] sm:$0x1]
    %61 = vrot.lane.b32.xlu0 %v60, 48
    %v62 = vpop.permute.xlu0 %61
    %vm63 = vcmask 458112
    %64 = vst.msk [vmem:[#allocation0] sm:$0x1] %vm63, %v62
    %s65 = scalar_lea.vmem %s0, 5
    %v66 = vld [vmem:[%s65] sm:$0x1]
    %67 = vrot.lane.b32.xlu0 %v66, 40
    %v68 = vpop.permute.xlu0 %67
    %vm69 = vcmask 392512
    %70 = vst.msk [vmem:[#allocation0] sm:$0x1] %vm69, %v68
    %s71 = scalar_lea.vmem %s0, 4
    %v72 = vld [vmem:[%s71] sm:$0x1]
    %73 = vrot.lane.b32.xlu0 %v72, 32
    %v74 = vpop.permute.xlu0 %73
    %vm75 = vcmask 326912
    %76 = vst.msk [vmem:[#allocation0] sm:$0x1] %vm75, %v74
    %s77 = scalar_lea.vmem %s0, 3
    %v78 = vld [vmem:[%s77] sm:$0x1]
    %79 = vrot.lane.b32.xlu0 %v78, 24
    %v80 = vpop.permute.xlu0 %79
    %vm81 = vcmask 261312
    %82 = vst.msk [vmem:[#allocation0] sm:$0x1] %vm81, %v80
    %s83 = scalar_lea.vmem %s0, 2
    %v84 = vld [vmem:[%s83] sm:$0x1]
    %85 = vrot.lane.b32.xlu0 %v84, 16
    %v86 = vpop.permute.xlu0 %85
    %vm87 = vcmask 195712
    %88 = vst.msk [vmem:[#allocation0] sm:$0x1] %vm87, %v86
    %s89 = scalar_lea.vmem %s0, 1
    %v90 = vld [vmem:[%s89] sm:$0x1]
    %91 = vrot.lane.b32.xlu0 %v90, 8
    %v92 = vpop.permute.xlu0 %91
    %vm93 = vcmask 130112
    %94 = vst.msk [vmem:[#allocation0] sm:$0x1] %vm93, %v92
    %s96 = sshllo.u32 0, 1
    %v98 = vld [vmem:[#allocation0] sm:%s96]
    %s99 = sshllo.u32 0, 1
    %100 = vst [vmem:[%s1] sm:%s99] %v98

// kernel: conv_bn_leaky_block.2
$region0: #{conv_bn_leaky_block.2}
  #allocation0 [shape = 'u32[]', space=smem, size = 0x4, offset = 0x4, fixed_abs, tag = 'smem constant byte address 0x4 - core index']
  #allocation1 [shape = 'u32[144,128]{1,0:T(1,128)}', space=vmem, size = 0x12000, scoped, tag = 'internal scratch']
  %s0 = inlined_call_operand.vmem [shape: bf16[2,18,64], index: 0, kind: input, shape index: {}]
  %s1 = inlined_call_operand.vmem [shape: bf16[3,64,128], index: 1, kind: input, shape index: {}]
  %s2 = inlined_call_operand.vmem [shape: bf16[32,128], index: 2, kind: output, shape index: {0}]
  %s3 = inlined_call_operand.vmem [shape: f32[2,1,128], index: 3, kind: output, shape index: {1}]
  %s4 = inlined_call_operand.vmem [shape: f32[2,1,128], index: 4, kind: output, shape index: {2}]
  %5 = xla_tuple %s2, %s3, %s4
  %s6 = sld [smem:[#allocation0]]
  $region57: #{conv_bn_leaky_block.2} parent=0
    _
  %s8 = ssub.s32 1, %s6
  %s9 = scalar_select 0, %s8, %s6
  loop: start=0, step=1, limit=4
  $region2: #{conv_bn_leaky_block.2} parent=0 // loop_pre_header
    _
  $region3: #{conv_bn_leaky_block.2} parent=0 // loop_header
    %s11 = sphi 0, %s15
    %p12 = scmp.ge.s32.totalorder %s11, 4
    %s21 = sphi 0, %s23
    %s24 = sphi 0, %s21
    %s25 = sphi 0, %s24
    %s41 = sphi 0, %s25
    %s45 = sphi 0, %s45
    %s47 = sphi 0, %s45
    %s48 = sphi 0, %s47
    %s62 = sphi 0, %s48
    %s68 = sphi 0, %s70
    %s71 = sphi 0, %s68
    %s72 = sphi 0, %s71
    %s88 = sphi 0, %s72
    %s94 = sphi 0, %s96
    %s97 = sphi 0, %s94
    %s98 = sphi 0, %s97
    %s114 = sphi 0, %s98
    %s120 = sphi 0, %s122
    %s123 = sphi 0, %s120
    %s124 = sphi 0, %s123
    %s140 = sphi 0, %s124
  $region4: #{conv_bn_leaky_block.2} parent=0 // loop_header_branch
    %14 = sbr.rel (%p12) target = $region8
  $region5: #{conv_bn_leaky_block.2} parent=0 // loop_body
    %s16 = ssub.s32 %s11, 1
    %s17 = ssub.s32 %s11, 2
    %s18 = sadd.s32 %s11, 1
    %s19 = ssub.s32 %s11, %s18
    %p20 = scmp.eq.s32.totalorder %s19, 0
    %s22 = sadd.s32 %s21, 1
    %s23 = scalar_select %p20, %s21, %s22
    %p26 = pneg %p20
    %p27 = scmp.eq.s32.totalorder %s11, 1
    %p28 = por %p26, %p27
    %p29 = scmp.ne.s32.totalorder %s21, %s24
    %p30 = scmp.eq.s32.totalorder %s11, 0
    %p31 = por %p29, %p30
    %p32 = scmp.ne.s32.totalorder %s21, %s24
    %p33 = scmp.eq.s32.totalorder %s16, 1
    %p34 = por %p32, %p33
    %p35 = scmp.ne.s32.totalorder %s24, %s25
    %p36 = scmp.eq.s32.totalorder %s16, 0
    %p37 = por %p35, %p36
    %p38 = scmp.ne.s32.totalorder %s24, %s25
    %p39 = scmp.eq.s32.totalorder %s17, 1
    %p40 = por %p38, %p39
    %p42 = scmp.ne.s32.totalorder %s25, %s41
    %p43 = scmp.eq.s32.totalorder %s17, 0
    %p44 = por %p42, %p43
    %s46 = sadd.s32 %s45, 1
    %p49 = scmp.eq.s32.totalorder %s11, 1
    %p50 = scmp.ne.s32.totalorder %s45, %s47
    %p51 = scmp.eq.s32.totalorder %s11, 0
    %p52 = por %p50, %p51
    %p53 = scmp.ne.s32.totalorder %s45, %s47
    %p54 = scmp.eq.s32.totalorder %s16, 1
    %p55 = por %p53, %p54
    %p56 = scmp.ne.s32.totalorder %s47, %s48
    %p57 = scmp.eq.s32.totalorder %s16, 0
    %p58 = por %p56, %p57
    %p59 = scmp.ne.s32.totalorder %s47, %s48
    %p60 = scmp.eq.s32.totalorder %s17, 1
    %p61 = por %p59, %p60
    %p63 = scmp.ne.s32.totalorder %s48, %s62
    %p64 = scmp.eq.s32.totalorder %s17, 0
    %p65 = por %p63, %p64
    %s66 = ssub.s32 %s11, %s18
    %p67 = scmp.eq.s32.totalorder %s66, 0
    %s69 = sadd.s32 %s68, 1
    %s70 = scalar_select %p67, %s68, %s69
    %p73 = pneg %p67
    %p74 = scmp.eq.s32.totalorder %s11, 1
    %p75 = por %p73, %p74
    %p76 = scmp.ne.s32.totalorder %s68, %s71
    %p77 = scmp.eq.s32.totalorder %s11, 0
    %p78 = por %p76, %p77
    %p79 = scmp.ne.s32.totalorder %s68, %s71
    %p80 = scmp.eq.s32.totalorder %s16, 1
    %p81 = por %p79, %p80
    %p82 = scmp.ne.s32.totalorder %s71, %s72
    %p83 = scmp.eq.s32.totalorder %s16, 0
    %p84 = por %p82, %p83
    %p85 = scmp.ne.s32.totalorder %s71, %s72
    %p86 = scmp.eq.s32.totalorder %s17, 1
    %p87 = por %p85, %p86
    %p89 = scmp.ne.s32.totalorder %s72, %s88
    %p90 = scmp.eq.s32.totalorder %s17, 0
    %p91 = por %p89, %p90
    %s92 = ssub.s32 %s11, %s18
    %p93 = scmp.eq.s32.totalorder %s92, 0
    %s95 = sadd.s32 %s94, 1
    %s96 = scalar_select %p93, %s94, %s95
    %p99 = pneg %p93
    %p100 = scmp.eq.s32.totalorder %s11, 1
    %p101 = por %p99, %p100
    %p102 = scmp.ne.s32.totalorder %s94, %s97
    %p103 = scmp.eq.s32.totalorder %s11, 0
    %p104 = por %p102, %p103
    %p105 = scmp.ne.s32.totalorder %s94, %s97
    %p106 = scmp.eq.s32.totalorder %s16, 1
    %p107 = por %p105, %p106
    %p108 = scmp.ne.s32.totalorder %s97, %s98
    %p109 = scmp.eq.s32.totalorder %s16, 0
    %p110 = por %p108, %p109
    %p111 = scmp.ne.s32.totalorder %s97, %s98
    %p112 = scmp.eq.s32.totalorder %s17, 1
    %p113 = por %p111, %p112
    %p115 = scmp.ne.s32.totalorder %s98, %s114
    %p116 = scmp.eq.s32.totalorder %s17, 0
    %p117 = por %p115, %p116
    %s118 = ssub.s32 %s11, %s18
    %p119 = scmp.eq.s32.totalorder %s118, 0
    %s121 = sadd.s32 %s120, 1
    %s122 = scalar_select %p119, %s120, %s121
    %p125 = pneg %p119
    %p126 = scmp.eq.s32.totalorder %s11, 1
    %p127 = por %p125, %p126
    %p128 = scmp.ne.s32.totalorder %s120, %s123
    %p129 = scmp.eq.s32.totalorder %s11, 0
    %p130 = por %p128, %p129
    %p131 = scmp.ne.s32.totalorder %s120, %s123
    %p132 = scmp.eq.s32.totalorder %s16, 1
    %p133 = por %p131, %p132
    %p134 = scmp.ne.s32.totalorder %s123, %s124
    %p135 = scmp.eq.s32.totalorder %s16, 0
    %p136 = por %p134, %p135
    %p137 = scmp.ne.s32.totalorder %s123, %s124
    %p138 = scmp.eq.s32.totalorder %s17, 1
    %p139 = por %p137, %p138
    %p141 = scmp.ne.s32.totalorder %s124, %s140
    %p142 = scmp.eq.s32.totalorder %s17, 0
    %p143 = por %p141, %p142
    %p144 = scmp.le.s32.totalorder 1, %s11
    %p145 = scmp.lt.s32.totalorder %s11, 3
    %p146 = pnand %p144, %p145
    %p147 = pneg %p146
    // Predicated region
    $region9: #{conv_bn_leaky_block.2} parent=5 // pred_check
      _
    $region10: #{conv_bn_leaky_block.2} parent=5 // pred_check_branch
      %149 = sbr.rel (%p146) target = $region12
    $region11: #{conv_bn_leaky_block.2} parent=5 // pred_region
      %s150 = ssub.s32 %s11, 1
      // Predicated region
      $region13: #{conv_bn_leaky_block.2} parent=11 // pred_check
        %p151 = pneg %p58
      $region14: #{conv_bn_leaky_block.2} parent=11 // pred_check_branch
        %153 = sbr.rel (%p151) target = $region16
      $region15: #{conv_bn_leaky_block.2} parent=11 // pred_region
        _
      $region16: #{conv_bn_leaky_block.2} parent=11 // pred_fallthru
        _
    $region12: #{conv_bn_leaky_block.2} parent=5 // pred_fallthru
      _
    %p154 = scmp.lt.s32.totalorder %s11, 2
    // Predicated region
    $region17: #{conv_bn_leaky_block.2} parent=5 // pred_check
      %p155 = pneg %p154
    $region18: #{conv_bn_leaky_block.2} parent=5 // pred_check_branch
      %157 = sbr.rel (%p155) target = $region20
    $region19: #{conv_bn_leaky_block.2} parent=5 // pred_region
      // Predicated region
      $region21: #{conv_bn_leaky_block.2} parent=19 // pred_check
        %p158 = pneg %p31
      $region22: #{conv_bn_leaky_block.2} parent=19 // pred_check_branch
        %160 = sbr.rel (%p158) target = $region24
      $region23: #{conv_bn_leaky_block.2} parent=19 // pred_region
        %p161 = scmp.lt.s32.totalorder %s11, 1
        %s162 = scalar_select %p161, %s11, 1
        %s163 = smul.addr %s162, 3
        %s164 = smul.addr %s163, 4
        %s165 = scalar_lea.vmem %s0, %s164
      $region24: #{conv_bn_leaky_block.2} parent=19 // pred_fallthru
        _
    $region20: #{conv_bn_leaky_block.2} parent=5 // pred_fallthru
      _
    %p166 = scmp.le.s32.totalorder 1, %s11
    %p167 = scmp.lt.s32.totalorder %s11, 3
    %p168 = pnand %p166, %p167
    %p169 = pneg %p168
    // Predicated region
    $region25: #{conv_bn_leaky_block.2} parent=5 // pred_check
      _
    $region26: #{conv_bn_leaky_block.2} parent=5 // pred_check_branch
      %171 = sbr.rel (%p168) target = $region28
    $region27: #{conv_bn_leaky_block.2} parent=5 // pred_region
      %s172 = ssub.s32 %s11, 1
      %p173 = scmp.lt.s32.totalorder %s16, 1
      %s174 = scalar_select %p173, %s16, 1
      %s175 = smul.addr %s174, 3
      %s176 = smul.addr %s175, 4
      %s177 = scalar_lea.vmem %s0, %s176
      %p178 = pneg %p37
      %p179 = pneg %p34
      %p180 = pneg %p58
      %p181 = pneg %p55
      %p182 = pneg %p84
      %p183 = pneg %p81
      %s184 = smul.u32 2, %s16
      %p185 = scmp.lt.s32.totalorder %s184, 3
      %s186 = scalar_select %p185, %s184, 3
      %s187 = smul.addr %s186, 4
      %s188 = scalar_lea.vmem %s2, %s187
      %p189 = pneg %p110
      %p190 = pneg %p107
      %p191 = scmp.lt.s32.totalorder %s16, 1
      %s192 = scalar_select %p191, %s16, 1
      %s193 = scalar_lea.vmem %s3, %s192
      %p194 = pneg %p136
      %p195 = pneg %p133
      %p196 = scmp.lt.s32.totalorder %s16, 1
      %s197 = scalar_select %p196, %s16, 1
      %s198 = scalar_lea.vmem %s4, %s197
      %p199 = scmp.lt.s32.totalorder %s16, 1
      %s200 = scalar_select %p199, %s16, 1
      %s201 = smul.addr %s200, 3
      %s202 = smul.addr %s201, 4
      %s203 = scalar_lea.vmem %s0, %s202
      %s204 = smul.u32 2, %s16
      %p205 = scmp.lt.s32.totalorder %s204, 3
      %s206 = scalar_select %p205, %s204, 3
      %s207 = smul.addr %s206, 4
      %s208 = scalar_lea.vmem %s2, %s207
      %s209 = smul.u32 2, %s16
      %p210 = scmp.lt.s32.totalorder %s16, 1
      %s211 = scalar_select %p210, %s16, 1
      %s212 = scalar_lea.vmem %s3, %s211
      %p213 = scmp.lt.s32.totalorder %s16, 1
      %s214 = scalar_select %p213, %s16, 1
      %s215 = scalar_lea.vmem %s4, %s214
      %v217 = vld [vmem:[%s203] sm:$0xf]
      %v218 = vld [vmem:[%s203 + $0x4] sm:$0xf]
      %v219 = vld [vmem:[%s1] sm:$0xf]
      %v220 = vld [vmem:[%s1 + $0x4] sm:$0xf]
      %v221 = vld [vmem:[%s1 + $0x8] sm:$0xf]
      %v222 = vld [vmem:[%s1 + $0xc] sm:$0xf]
      %v223 = vld [vmem:[%s1 + $0x10] sm:$0xf]
      %v224 = vld [vmem:[%s1 + $0x14] sm:$0xf]
      %v225 = vld [vmem:[%s1 + $0x18] sm:$0xf]
      %v226 = vld [vmem:[%s1 + $0x1c] sm:$0xf]
      %v227 = vld [vmem:[%s203 + $0x8] sm:$0x1]
      %s228 = scalar_lea.vmem %s1, 32
      %v229 = vld [vmem:[%s228] sm:$0xf]
      %v230 = vld [vmem:[%s228 + $0x4] sm:$0xf]
      %v231 = vld [vmem:[%s228 + $0x8] sm:$0xf]
      %v232 = vld [vmem:[%s228 + $0xc] sm:$0xf]
      %v233 = vld [vmem:[%s228 + $0x10] sm:$0xf]
      %v234 = vld [vmem:[%s228 + $0x14] sm:$0xf]
      %v235 = vld [vmem:[%s228 + $0x18] sm:$0xf]
      %v236 = vld [vmem:[%s228 + $0x1c] sm:$0xf]
      %v240 = vunpack.c.l.b16 %v217
      %v241 = vunpack.c.l.b16 %v218
      %v242 = vunpack.c.l.b16 %v227
      %v243 = vpack.c.b16 %v241, %v240
      %v244 = vpack.c.b16 %v242, %v242
      %vm245 = vsmask.f32 7424
      %v247 = vshrl.u32 %v243, 16
      %v249 = vshll.u32 %v243, 16
      %v251 = vrot.slane %v249, 1
      %v252 = vor.u32 %v247, %v251
      %v254 = vshll.u32 %v244, 16
      %v256 = vrot.slane %v254, 1
      %v257 = vsel %vm245, %v252, %v256
      %v266 = vunpack.c.l.b16 %v229
      %v267 = vunpack.c.l.b16 %v230
      %v268 = vunpack.c.l.b16 %v231
      %v269 = vunpack.c.l.b16 %v232
      %v270 = vunpack.c.l.b16 %v233
      %v271 = vunpack.c.l.b16 %v234
      %v272 = vunpack.c.l.b16 %v235
      %v273 = vunpack.c.l.b16 %v236
      %v274 = vpack.c.b16 %v267, %v266
      %v275 = vpack.c.b16 %v269, %v268
      %v276 = vpack.c.b16 %v271, %v270
      %v277 = vpack.c.b16 %v273, %v272
      %vm282 = vcmask 523264
      %v284 = vsel %vm282, %v257, 0
      %286 = vmatprep.subr.bf16.mxu0 0
      %287 = vmatpush1.bf16.msra.mxu0 %v274
      %288 = vmatprep.subr.bf16.mxu0 0
      %289 = vmatpush1.bf16.msra.mxu0 %v275
      %290 = vmatprep.subr.bf16.mxu0 0
      %291 = vmatpush1.bf16.msra.mxu0 %v276
      %292 = vmatprep.subr.bf16.mxu0 0
      %293 = vmatpush1.bf16.msra.mxu0 %v277
      %294 = vmatprep.subr.bf16.mxu0 0
      %295 = vmatpush1.bf16.msra.mxu0 0
      %296 = vmatprep.subr.bf16.mxu0 0
      %297 = vmatpush1.bf16.msra.mxu0 0
      %298 = vmatprep.subr.bf16.mxu0 0
      %299 = vmatpush1.bf16.msra.mxu0 0
      %300 = vmatprep.subr.bf16.mxu0 0
      %301 = vmatpush1.bf16.msra.mxu0 0
      %302 = vmatprep.subr.bf16.mxu0 0
      %303 = vmatpush1.bf16.msra.mxu0 0
      %304 = vmatprep.subr.bf16.mxu0 0
      %305 = vmatpush1.bf16.msra.mxu0 0
      %306 = vmatprep.subr.bf16.mxu0 0
      %307 = vmatpush1.bf16.msra.mxu0 0
      %308 = vmatprep.subr.bf16.mxu0 0
      %309 = vmatpush1.bf16.msra.mxu0 0
      %310 = vmatprep.subr.bf16.mxu0 0
      %311 = vmatpush1.bf16.msra.mxu0 0
      %312 = vmatprep.subr.bf16.mxu0 0
      %313 = vmatpush1.bf16.msra.mxu0 0
      %314 = vmatprep.subr.bf16.mxu0 0
      %315 = vmatpush1.bf16.msra.mxu0 0
      %316 = vmatprep.subr.bf16.mxu0 0
      %317 = vmatpush1.bf16.msra.mxu0 0
      %318 = vmatprep.mubr.bf16.mxu0 0
      %319 = vmatmul.mubr.bf16.gmra.mrb[0].mxu0 %v284
      %v320 = vpop.f32.mrb[0].mxu0
      %v321 = vadd.f32 0.0, %v320
      %v322 = vpop.f32.mrb[0].mxu0
      %v323 = vpop.f32.mrb[0].mxu0
      %v324 = vadd.f32 0.0, %v323
      %v325 = vpop.f32.mrb[0].mxu0
      %326 = vdwg.mxu0
      %v335 = vunpack.c.l.b16 %v219
      %v336 = vunpack.c.l.b16 %v220
      %v337 = vunpack.c.l.b16 %v221
      %v338 = vunpack.c.l.b16 %v222
      %v339 = vunpack.c.l.b16 %v223
      %v340 = vunpack.c.l.b16 %v224
      %v341 = vunpack.c.l.b16 %v225
      %v342 = vunpack.c.l.b16 %v226
      %v343 = vpack.c.b16 %v336, %v335
      %v344 = vpack.c.b16 %v338, %v337
      %v345 = vpack.c.b16 %v340, %v339
      %v346 = vpack.c.b16 %v342, %v341
      %v351 = vsel %vm282, %v243, 0
      %353 = vmatprep.subr.bf16.mxu0 0
      %354 = vmatpush1.bf16.msra.mxu0 %v343
      %355 = vmatprep.subr.bf16.mxu0 0
      %356 = vmatpush1.bf16.msra.mxu0 %v344
      %357 = vmatprep.subr.bf16.mxu0 0
      %358 = vmatpush1.bf16.msra.mxu0 %v345
      %359 = vmatprep.subr.bf16.mxu0 0
      %360 = vmatpush1.bf16.msra.mxu0 %v346
      %361 = vmatprep.subr.bf16.mxu0 0
      %362 = vmatpush1.bf16.msra.mxu0 0
      %363 = vmatprep.subr.bf16.mxu0 0
      %364 = vmatpush1.bf16.msra.mxu0 0
      %365 = vmatprep.subr.bf16.mxu0 0
      %366 = vmatpush1.bf16.msra.mxu0 0
      %367 = vmatprep.subr.bf16.mxu0 0
      %368 = vmatpush1.bf16.msra.mxu0 0
      %369 = vmatprep.subr.bf16.mxu0 0
      %370 = vmatpush1.bf16.msra.mxu0 0
      %371 = vmatprep.subr.bf16.mxu0 0
      %372 = vmatpush1.bf16.msra.mxu0 0
      %373 = vmatprep.subr.bf16.mxu0 0
      %374 = vmatpush1.bf16.msra.mxu0 0
      %375 = vmatprep.subr.bf16.mxu0 0
      %376 = vmatpush1.bf16.msra.mxu0 0
      %377 = vmatprep.subr.bf16.mxu0 0
      %378 = vmatpush1.bf16.msra.mxu0 0
      %379 = vmatprep.subr.bf16.mxu0 0
      %380 = vmatpush1.bf16.msra.mxu0 0
      %381 = vmatprep.subr.bf16.mxu0 0
      %382 = vmatpush1.bf16.msra.mxu0 0
      %383 = vmatprep.subr.bf16.mxu0 0
      %384 = vmatpush1.bf16.msra.mxu0 0
      %385 = vmatprep.mubr.bf16.mxu0 0
      %386 = vmatmul.mubr.bf16.gmra.mrb[0].mxu0 %v351
      %v387 = vpop.f32.mrb[0].mxu0
      %v388 = vadd.f32 %v321, %v387
      %v389 = vpop.f32.mrb[0].mxu0
      %v390 = vpop.f32.mrb[0].mxu0
      %v391 = vadd.f32 %v324, %v390
      %v392 = vpop.f32.mrb[0].mxu0
      %393 = vdwg.mxu0
      %v394 = vld [vmem:[%s203] sm:$0xe]
      %s395 = scalar_lea.vmem %s1, 64
      %v396 = vld [vmem:[%s395] sm:$0xf]
      %v397 = vld [vmem:[%s395 + $0x4] sm:$0xf]
      %v398 = vld [vmem:[%s395 + $0x8] sm:$0xf]
      %v399 = vld [vmem:[%s395 + $0xc] sm:$0xf]
      %v400 = vld [vmem:[%s395 + $0x10] sm:$0xf]
      %v401 = vld [vmem:[%s395 + $0x14] sm:$0xf]
      %v402 = vld [vmem:[%s395 + $0x18] sm:$0xf]
      %v403 = vld [vmem:[%s395 + $0x1c] sm:$0xf]
      %v405 = vunpack.c.l.b16 %v394
      %v406 = vpack.c.b16 %v241, %v405
      %vm407 = vcmask 1046528
      %v408 = vrot.slane %v406, 1
      %v409 = vrot.slane %v244, 1
      %v410 = vsel %vm407, %v408, %v409
      %v419 = vunpack.c.l.b16 %v396
      %v420 = vunpack.c.l.b16 %v397
      %v421 = vunpack.c.l.b16 %v398
      %v422 = vunpack.c.l.b16 %v399
      %v423 = vunpack.c.l.b16 %v400
      %v424 = vunpack.c.l.b16 %v401
      %v425 = vunpack.c.l.b16 %v402
      %v426 = vunpack.c.l.b16 %v403
      %v427 = vpack.c.b16 %v420, %v419
      %v428 = vpack.c.b16 %v422, %v421
      %v429 = vpack.c.b16 %v424, %v423
      %v430 = vpack.c.b16 %v426, %v425
      %v436 = vsel %vm282, %v410, 0
      %438 = vmatprep.subr.bf16.mxu0 0
      %439 = vmatpush1.bf16.msra.mxu0 %v427
      %440 = vmatprep.subr.bf16.mxu0 0
      %441 = vmatpush1.bf16.msra.mxu0 %v428
      %442 = vmatprep.subr.bf16.mxu0 0
      %443 = vmatpush1.bf16.msra.mxu0 %v429
      %444 = vmatprep.subr.bf16.mxu0 0
      %445 = vmatpush1.bf16.msra.mxu0 %v430
      %446 = vmatprep.subr.bf16.mxu0 0
      %447 = vmatpush1.bf16.msra.mxu0 0
      %448 = vmatprep.subr.bf16.mxu0 0
      %449 = vmatpush1.bf16.msra.mxu0 0
      %450 = vmatprep.subr.bf16.mxu0 0
      %451 = vmatpush1.bf16.msra.mxu0 0
      %452 = vmatprep.subr.bf16.mxu0 0
      %453 = vmatpush1.bf16.msra.mxu0 0
      %454 = vmatprep.subr.bf16.mxu0 0
      %455 = vmatpush1.bf16.msra.mxu0 0
      %456 = vmatprep.subr.bf16.mxu0 0
      %457 = vmatpush1.bf16.msra.mxu0 0
      %458 = vmatprep.subr.bf16.mxu0 0
      %459 = vmatpush1.bf16.msra.mxu0 0
      %460 = vmatprep.subr.bf16.mxu0 0
      %461 = vmatpush1.bf16.msra.mxu0 0
      %462 = vmatprep.subr.bf16.mxu0 0
      %463 = vmatpush1.bf16.msra.mxu0 0
      %464 = vmatprep.subr.bf16.mxu0 0
      %465 = vmatpush1.bf16.msra.mxu0 0
      %466 = vmatprep.subr.bf16.mxu0 0
      %467 = vmatpush1.bf16.msra.mxu0 0
      %468 = vmatprep.subr.bf16.mxu0 0
      %469 = vmatpush1.bf16.msra.mxu0 0
      %470 = vmatprep.mubr.bf16.mxu0 0
      %471 = vmatmul.mubr.bf16.gmra.mrb[0].mxu0 %v436
      %v472 = vpop.f32.mrb[0].mxu0
      %v473 = vadd.f32 0.0, %v472
      %v474 = vpop.f32.mrb[0].mxu0
      %v475 = vpop.f32.mrb[0].mxu0
      %v476 = vadd.f32 0.0, %v475
      %v477 = vpop.f32.mrb[0].mxu0
      %478 = vdwg.mxu0
      %v479 = vadd.f32 %v388, %v473
      %v480 = vadd.f32 %v391, %v476
      %v481 = vpack.c.bf16 %v480, %v479
      %v483 = vunpack.c.l.b16 %v481
      %v484 = vunpack.c.h.b16 %v481
      %v485 = vpack.c.b16 %v483, %v483
      %v486 = vpack.c.b16 %v484, %v484
      %489 = vst [vmem:[%s208] sm:$0xf] %v485
      %490 = vst [vmem:[%s208 + $0x4] sm:$0xf] %v486
      %v491 = vadd.f32 %v479, %v480
      %v492 = vrot.slane %v491, 4
      %v493 = vadd.f32 %v491, %v492
      %v494 = vrot.slane %v493, 2
      %v495 = vadd.f32 %v493, %v494
      %v496 = vrot.slane %v495, 1
      %v497 = vadd.f32 %v495, %v496
      %498 = vst [vmem:[%s212] sm:$0x1] %v497
      %v499 = vmul.f32 %v479, %v479
      %v500 = vmul.f32 %v480, %v480
      %v501 = vadd.f32 %v499, %v500
      %v502 = vrot.slane %v501, 4
      %v503 = vadd.f32 %v501, %v502
      %v504 = vrot.slane %v503, 2
      %v505 = vadd.f32 %v503, %v504
      %v506 = vrot.slane %v505, 1
      %v507 = vadd.f32 %v505, %v506
      %508 = vst [vmem:[%s215] sm:$0x1] %v507
      %s509 = smul.u32 2, %s16
      %p510 = scmp.lt.s32.totalorder %s509, 3
      %s511 = scalar_select %p510, %s509, 3
      %s512 = smul.addr %s511, 4
      %s513 = scalar_lea.vmem %s2, %s512
      %p514 = scmp.lt.s32.totalorder %s16, 1
      %s515 = scalar_select %p514, %s16, 1
      %s516 = scalar_lea.vmem %s3, %s515
      %p517 = scmp.lt.s32.totalorder %s16, 1
      %s518 = scalar_select %p517, %s16, 1
      %s519 = scalar_lea.vmem %s4, %s518
      // Predicated region
      $region29: #{conv_bn_leaky_block.2} parent=27 // pred_check
        %p520 = pneg %p81
      $region30: #{conv_bn_leaky_block.2} parent=27 // pred_check_branch
        %522 = sbr.rel (%p520) target = $region32
      $region31: #{conv_bn_leaky_block.2} parent=27 // pred_region
        %s523 = smul.u32 2, %s16
      $region32: #{conv_bn_leaky_block.2} parent=27 // pred_fallthru
        _
      // Predicated region
      $region33: #{conv_bn_leaky_block.2} parent=27 // pred_check
        %p524 = pneg %p107
      $region34: #{conv_bn_leaky_block.2} parent=27 // pred_check_branch
        %526 = sbr.rel (%p524) target = $region36
      $region35: #{conv_bn_leaky_block.2} parent=27 // pred_region
        _
      $region36: #{conv_bn_leaky_block.2} parent=27 // pred_fallthru
        _
      // Predicated region
      $region37: #{conv_bn_leaky_block.2} parent=27 // pred_check
        %p527 = pneg %p133
      $region38: #{conv_bn_leaky_block.2} parent=27 // pred_check_branch
        %529 = sbr.rel (%p527) target = $region40
      $region39: #{conv_bn_leaky_block.2} parent=27 // pred_region
        _
      $region40: #{conv_bn_leaky_block.2} parent=27 // pred_fallthru
        _
    $region28: #{conv_bn_leaky_block.2} parent=5 // pred_fallthru
      _
    %p530 = scmp.le.s32.totalorder 2, %s11
    // Predicated region
    $region41: #{conv_bn_leaky_block.2} parent=5 // pred_check
      %p531 = pneg %p530
    $region42: #{conv_bn_leaky_block.2} parent=5 // pred_check_branch
      %533 = sbr.rel (%p531) target = $region44
    $region43: #{conv_bn_leaky_block.2} parent=5 // pred_region
      %s534 = ssub.s32 %s11, 2
      // Predicated region
      $region45: #{conv_bn_leaky_block.2} parent=43 // pred_check
        %p535 = pneg %p87
      $region46: #{conv_bn_leaky_block.2} parent=43 // pred_check_branch
        %537 = sbr.rel (%p535) target = $region48
      $region47: #{conv_bn_leaky_block.2} parent=43 // pred_region
        %s538 = smul.u32 2, %s17
        %p539 = scmp.lt.s32.totalorder %s538, 3
        %s540 = scalar_select %p539, %s538, 3
        %s541 = smul.addr %s540, 4
        %s542 = scalar_lea.vmem %s2, %s541
      $region48: #{conv_bn_leaky_block.2} parent=43 // pred_fallthru
        _
      // Predicated region
      $region49: #{conv_bn_leaky_block.2} parent=43 // pred_check
        %p543 = pneg %p113
      $region50: #{conv_bn_leaky_block.2} parent=43 // pred_check_branch
        %545 = sbr.rel (%p543) target = $region52
      $region51: #{conv_bn_leaky_block.2} parent=43 // pred_region
        %p546 = scmp.lt.s32.totalorder %s17, 1
        %s547 = scalar_select %p546, %s17, 1
        %s548 = scalar_lea.vmem %s3, %s547
      $region52: #{conv_bn_leaky_block.2} parent=43 // pred_fallthru
        _
      // Predicated region
      $region53: #{conv_bn_leaky_block.2} parent=43 // pred_check
        %p549 = pneg %p139
      $region54: #{conv_bn_leaky_block.2} parent=43 // pred_check_branch
        %551 = sbr.rel (%p549) target = $region56
      $region55: #{conv_bn_leaky_block.2} parent=43 // pred_region
        %p552 = scmp.lt.s32.totalorder %s17, 1
        %s553 = scalar_select %p552, %s17, 1
        %s554 = scalar_lea.vmem %s4, %s553
      $region56: #{conv_bn_leaky_block.2} parent=43 // pred_fallthru
        _
    $region44: #{conv_bn_leaky_block.2} parent=5 // pred_fallthru
      _
  $region6: #{conv_bn_leaky_block.2} parent=0 // loop_footer
    %s15 = sadd.s32 1, %s11
  $region7: #{conv_bn_leaky_block.2} parent=0 // loop_footer_branch
    %10 = sbr.rel target = $region3
  $region8: #{conv_bn_leaky_block.2} parent=0 // loop_exit
    _

// kernel: conv_bn_leaky_block.3
$region0: #{conv_bn_leaky_block.3}
  #allocation0 [shape = 'u32[]', space=smem, size = 0x4, offset = 0x4, fixed_abs, tag = 'smem constant byte address 0x4 - core index']
  #allocation1 [shape = 'u32[144,128]{1,0:T(1,128)}', space=vmem, size = 0x12000, scoped, tag = 'internal scratch']
  %s0 = inlined_call_operand.vmem [shape: bf16[32,128], index: 0, kind: input, shape index: {}, may-alias: {0,3}]
  %s1 = inlined_call_operand.vmem [shape: f32[1,128], index: 1, kind: input, shape index: {}]
  %s2 = inlined_call_operand.vmem [shape: f32[1,128], index: 2, kind: input, shape index: {}]
  %s3 = inlined_call_operand.vmem [shape: bf16[32,128], index: 3, kind: output, shape index: {}, may-alias: {0,3}]
  %s4 = sld [smem:[#allocation0]]
  $region22: #{conv_bn_leaky_block.3} parent=0
    _
  %s6 = ssub.s32 1, %s4
  %s7 = scalar_select 0, %s6, %s4
  // Predicated region
  $region2: #{conv_bn_leaky_block.3} parent=0 // pred_check
    _
  $region3: #{conv_bn_leaky_block.3} parent=0 // pred_check_branch
    %9 = sbr.rel (0) target = $region5
  $region4: #{conv_bn_leaky_block.3} parent=0 // pred_region
    _
  $region5: #{conv_bn_leaky_block.3} parent=0 // pred_fallthru
    _
  // Predicated region
  $region6: #{conv_bn_leaky_block.3} parent=0 // pred_check
    _
  $region7: #{conv_bn_leaky_block.3} parent=0 // pred_check_branch
    %11 = sbr.rel (0) target = $region9
  $region8: #{conv_bn_leaky_block.3} parent=0 // pred_region
    _
  $region9: #{conv_bn_leaky_block.3} parent=0 // pred_fallthru
    _
  // Predicated region
  $region10: #{conv_bn_leaky_block.3} parent=0 // pred_check
    _
  $region11: #{conv_bn_leaky_block.3} parent=0 // pred_check_branch
    %13 = sbr.rel (0) target = $region13
  $region12: #{conv_bn_leaky_block.3} parent=0 // pred_region
    _
  $region13: #{conv_bn_leaky_block.3} parent=0 // pred_fallthru
    _
  %v14 = vld [vmem:[%s0] sm:$0xf]
  %v15 = vld [vmem:[%s0 + $0x4] sm:$0xf]
  %v16 = vld [vmem:[%s0 + $0x8] sm:$0xf]
  %v17 = vld [vmem:[%s0 + $0xc] sm:$0xf]
  %v18 = vunpack.c.l.bf16 %v14
  %v19 = vunpack.c.l.bf16 %v15
  %v20 = vunpack.c.l.bf16 %v16
  %v21 = vunpack.c.l.bf16 %v17
  %v22 = vld [vmem:[%s1] sm:$0x1]
  %v24 = vlaneseq
  %v25 = vshrl.u32 %v24, 7
  %v26 = vsub.s32 0, %v25
  %v27 = vrot.slane %v22, %v26
  %v29 = vmul.f32 %v18, %v27
  %v30 = vmul.f32 %v19, %v27
  %v31 = vmul.f32 %v20, %v27
  %v32 = vmul.f32 %v21, %v27
  %v33 = vld [vmem:[%s2] sm:$0x1]
  %v35 = vlaneseq
  %v36 = vshrl.u32 %v35, 7
  %v37 = vsub.s32 0, %v36
  %v38 = vrot.slane %v33, %v37
  %v40 = vadd.f32 %v29, %v38
  %v41 = vadd.f32 %v30, %v38
  %v42 = vadd.f32 %v31, %v38
  %v43 = vadd.f32 %v32, %v38
  %v44 = vmul.f32 %v40, 0.1
  %v45 = vmul.f32 %v41, 0.1
  %v46 = vmul.f32 %v42, 0.1
  %v47 = vmul.f32 %v43, 0.1
  %v48 = vmax.f32 %v40, %v44
  %v49 = vmax.f32 %v41, %v45
  %v50 = vmax.f32 %v42, %v46
  %v51 = vmax.f32 %v43, %v47
  %v52 = vpack.c.bf16 %v49, %v48
  %v53 = vpack.c.bf16 %v51, %v50
  %v56 = vunpack.c.l.b16 %v52
  %v57 = vunpack.c.h.b16 %v52
  %v58 = vunpack.c.l.b16 %v53
  %v59 = vunpack.c.h.b16 %v53
  %v60 = vpack.c.b16 %v56, %v56
  %v61 = vpack.c.b16 %v57, %v57
  %v62 = vpack.c.b16 %v58, %v58
  %v63 = vpack.c.b16 %v59, %v59
  %68 = vst [vmem:[%s3] sm:$0xf] %v60
  %69 = vst [vmem:[%s3 + $0x4] sm:$0xf] %v61
  %70 = vst [vmem:[%s3 + $0x8] sm:$0xf] %v62
  %71 = vst [vmem:[%s3 + $0xc] sm:$0xf] %v63
  // Predicated region
  $region14: #{conv_bn_leaky_block.3} parent=0 // pred_check
    _
  $region15: #{conv_bn_leaky_block.3} parent=0 // pred_check_branch
    %73 = sbr.rel (0) target = $region17
  $region16: #{conv_bn_leaky_block.3} parent=0 // pred_region
    _
  $region17: #{conv_bn_leaky_block.3} parent=0 // pred_fallthru
    _
  // Predicated region
  $region18: #{conv_bn_leaky_block.3} parent=0 // pred_check
    _
  $region19: #{conv_bn_leaky_block.3} parent=0 // pred_check_branch
    %75 = sbr.rel (0) target = $region21
  $region20: #{conv_bn_leaky_block.3} parent=0 // pred_region
    _
  $region21: #{conv_bn_leaky_block.3} parent=0 // pred_fallthru
    _

</llo_original>
